<compile_context>
chip_gen: v7x
topology: tpu7x:2x2x1
jax: 0.10.0
libtpu: 0.0.40
codegen_flags: <defaults>
</compile_context>

<pallas_src>
import functools
import math

import jax
import jax.numpy as jnp
from jax.experimental import pallas as pl
from jax.experimental.pallas import tpu as pltpu


def _round_up(n: int, m: int) -> int:
    return ((n + m - 1) // m) * m


@functools.lru_cache(maxsize=None)
def _vmem_limit_bytes() -> int:
    """Generation-aware scoped-VMEM limit: half the physical per-core VMEM,
    capped at 48 MiB (128 MiB on v5e/v6e, 64 MiB per TensorCore on v7x)."""
    try:
        cap = getattr(pltpu.get_tpu_info(), "vmem_capacity_bytes", None)
        if cap:
            return int(min(cap // 2, 48 * 1024 * 1024))
    except Exception:
        pass
    return 32 * 1024 * 1024


def _pick_tile_rows(n_rows: int, bytes_per_row: int, *, budget_bytes: int,
                    max_rows: int = 1024) -> int:
    """Largest row tile (multiple of 8) whose double-buffered blocks fit the
    VMEM budget, clamped to the (sublane-rounded) row count."""
    tr = budget_bytes // max(1, 2 * bytes_per_row)      # x2: double buffering
    tr = max(8, min(max_rows, (tr // 8) * 8))
    tr = min(tr, _round_up(n_rows, 8))
    if n_rows >= 256:
        # Keep >= 2 row blocks so the "parallel" grid axis can shard across the
        # two TensorCores on v7x (harmless extra grid step on 1-TC chips).
        tr = min(tr, _round_up((n_rows + 1) // 2, 8))
    return tr


# ---------------------------------------------------------------------------
# LayerNormalization kernels (optional fused residual add)
# ---------------------------------------------------------------------------
def _ln_math(x, gain, bias, eps):
    e = x.shape[-1]
    # Two-pass (mean, then centered sum of squares): tile is already resident
    # in VMEM, so the extra sweep is cheap and avoids catastrophic cancellation.
    mean = jnp.sum(x, axis=-1, keepdims=True) * (1.0 / e)
    d = x - mean
    var = jnp.sum(d * d, axis=-1, keepdims=True) * (1.0 / (e - 1))  # unbiased
    inv = pl.reciprocal(jnp.sqrt(var) + eps, approx=False)          # eps on std
    return d * inv * gain + bias


def _layer_norm_kernel(x_ref, g_ref, b_ref, o_ref, *, eps: float):
    x = x_ref[...].astype(jnp.float32)                              # (Tr, E)
    o_ref[...] = _ln_math(x, g_ref[...], b_ref[...], eps).astype(o_ref.dtype)


def _add_layer_norm_kernel(x_ref, r_ref, g_ref, b_ref, o_ref, *, eps: float):
    x = x_ref[...].astype(jnp.float32) + r_ref[...].astype(jnp.float32)
    o_ref[...] = _ln_math(x, g_ref[...], b_ref[...], eps).astype(o_ref.dtype)


def layer_norm_pallas(x, gain, bias, residual=None, *, eps: float = 1e-6,
                      max_tile_rows: int = 1024):
    """LayerNorm matching gain*(y-mean)/(std+eps)+bias with unbiased std,
    where y = x + residual (residual add fused into the kernel)."""
    orig_shape = x.shape
    e = orig_shape[-1]
    assert e >= 2, "unbiased std needs at least 2 elements along the last axis"
    x2 = x.reshape(-1, e)
    r = x2.shape[0]

    n_row_streams = 2 if residual is None else 3            # x (+ res) + out
    bytes_per_row = (n_row_streams + 1) * e * 4              # + f32 work copy
    limit = _vmem_limit_bytes()
    tr = _pick_tile_rows(r, bytes_per_row, budget_bytes=(limit * 3) // 4,
                         max_rows=max_tile_rows)

    g2 = gain.reshape(1, e).astype(jnp.float32)              # pre-cast, hoisted
    b2 = bias.reshape(1, e).astype(jnp.float32)

    row_spec = pl.BlockSpec((tr, e), lambda i: (i, 0))
    vec_spec = pl.BlockSpec((1, e), lambda i: (0, 0))

    if residual is None:
        kernel = functools.partial(_layer_norm_kernel, eps=eps)
        in_specs = [row_spec, vec_spec, vec_spec]
        args = (x2, g2, b2)
    else:
        kernel = functools.partial(_add_layer_norm_kernel, eps=eps)
        in_specs = [row_spec, row_spec, vec_spec, vec_spec]
        args = (x2, residual.reshape(-1, e), g2, b2)

    out = pl.pallas_call(
        kernel,
        out_shape=jax.ShapeDtypeStruct((r, e), x.dtype),
        grid_spec=pltpu.PrefetchScalarGridSpec(
            num_scalar_prefetch=0,
            grid=(pl.cdiv(r, tr),),                          # partial block OK
            in_specs=in_specs,
            out_specs=pl.BlockSpec((tr, e), lambda i: (i, 0)),
        ),
        compiler_params=pltpu.CompilerParams(
            dimension_semantics=("parallel",),
            vmem_limit_bytes=limit,
        ),
    )(*args)
    return out.reshape(orig_shape)


# ---------------------------------------------------------------------------
# Linear (+bias, optional fused ReLU) kernels — bias and no-bias variants
# ---------------------------------------------------------------------------
def _linear_bias_kernel(x_ref, w_ref, b_ref, o_ref, *, apply_relu: bool):
    # No up-cast: whatever dtype the operands are goes straight to the MXU;
    # the accumulator is forced to f32 via preferred_element_type.
    y = jnp.dot(x_ref[...], w_ref[...], preferred_element_type=jnp.float32)
    y = y + b_ref[...]
    if apply_relu:
        y = jnp.maximum(y, 0.0)
    o_ref[...] = y.astype(o_ref.dtype)


def _linear_nobias_kernel(x_ref, w_ref, o_ref, *, apply_relu: bool):
    y = jnp.dot(x_ref[...], w_ref[...], preferred_element_type=jnp.float32)
    if apply_relu:
        y = jnp.maximum(y, 0.0)
    o_ref[...] = y.astype(o_ref.dtype)


def linear_pallas(x, w, b=None, *, relu: bool = False, max_tile_rows: int = 1024):
    """y = relu?(x @ w [+ b]). x: (..., In); w: (In, Out); b: (Out,) or None."""
    orig_shape = x.shape
    in_dim, out_dim = w.shape
    x2 = x.reshape(-1, in_dim)
    r = x2.shape[0]

    limit = _vmem_limit_bytes()
    budget = (limit * 3) // 4
    w_bytes = in_dim * out_dim * jnp.dtype(w.dtype).itemsize
    bytes_per_row = (in_dim + 2 * out_dim) * 4               # in + out + acc
    avail = budget - 2 * w_bytes
    if avail < 2 * 8 * bytes_per_row:
        # TODO(synk): add K/N contraction tiling instead of this XLA fallback
        # once weights outgrow VMEM (first hazard on v7x's 64 MiB).
        y = x2 @ w
        if b is not None:
            y = y + b
        if relu:
            y = jnp.maximum(y, 0.0)
        return y.reshape(*orig_shape[:-1], out_dim)

    tr = _pick_tile_rows(r, bytes_per_row, budget_bytes=avail,
                         max_rows=max_tile_rows)

    row_spec = pl.BlockSpec((tr, in_dim), lambda i: (i, 0))
    w_spec = pl.BlockSpec((in_dim, out_dim), lambda i: (0, 0))
    out_spec = pl.BlockSpec((tr, out_dim), lambda i: (i, 0))

    if b is None:
        kernel = functools.partial(_linear_nobias_kernel, apply_relu=relu)
        in_specs = [row_spec, w_spec]
        args = (x2, w)
    else:
        kernel = functools.partial(_linear_bias_kernel, apply_relu=relu)
        in_specs = [row_spec, w_spec, pl.BlockSpec((1, out_dim), lambda i: (0, 0))]
        args = (x2, w, b.reshape(1, out_dim).astype(jnp.float32))

    out = pl.pallas_call(
        kernel,
        out_shape=jax.ShapeDtypeStruct((r, out_dim), x.dtype),
        grid_spec=pltpu.PrefetchScalarGridSpec(
            num_scalar_prefetch=0,
            grid=(pl.cdiv(r, tr),),
            in_specs=in_specs,
            out_specs=out_spec,
        ),
        compiler_params=pltpu.CompilerParams(
            dimension_semantics=("parallel",),
            vmem_limit_bytes=limit,
        ),
    )(*args)
    return out.reshape(*orig_shape[:-1], out_dim)


# ---------------------------------------------------------------------------
# Fused FeedForward kernel: relu(x @ w1 + b1) @ w2 + b2 in one pallas_call
# ---------------------------------------------------------------------------
def _ffn_kernel(x_ref, w1_ref, b1_ref, w2_ref, b2_ref, o_ref):
    h = jnp.dot(x_ref[...], w1_ref[...], preferred_element_type=jnp.float32)
    h = jnp.maximum(h + b1_ref[...], 0.0).astype(w2_ref.dtype)
    y = jnp.dot(h, w2_ref[...], preferred_element_type=jnp.float32) + b2_ref[...]
    o_ref[...] = y.astype(o_ref.dtype)


def ffn_pallas(x, w1, b1, w2, b2, *, max_tile_rows: int = 512):
    orig_shape = x.shape
    in_dim, hid = w1.shape
    hid2, out_dim = w2.shape
    assert hid == hid2
    x2 = x.reshape(-1, in_dim)
    r = x2.shape[0]

    limit = _vmem_limit_bytes()
    budget = (limit * 3) // 4
    w_bytes = (in_dim * hid * jnp.dtype(w1.dtype).itemsize
               + hid * out_dim * jnp.dtype(w2.dtype).itemsize)
    bytes_per_row = (in_dim + 2 * hid + 2 * out_dim) * 4
    avail = budget - 2 * w_bytes
    if avail < 2 * 8 * bytes_per_row:
        # TODO(synk): tile the hidden dim for production-size FFN weights.
        return linear_pallas(linear_pallas(x, w1, b1, relu=True), w2, b2)

    tr = _pick_tile_rows(r, bytes_per_row, budget_bytes=avail,
                         max_rows=max_tile_rows)

    out = pl.pallas_call(
        _ffn_kernel,
        out_shape=jax.ShapeDtypeStruct((r, out_dim), x.dtype),
        grid_spec=pltpu.PrefetchScalarGridSpec(
            num_scalar_prefetch=0,
            grid=(pl.cdiv(r, tr),),
            in_specs=[
                pl.BlockSpec((tr, in_dim), lambda i: (i, 0)),
                pl.BlockSpec((in_dim, hid), lambda i: (0, 0)),
                pl.BlockSpec((1, hid), lambda i: (0, 0)),
                pl.BlockSpec((hid, out_dim), lambda i: (0, 0)),
                pl.BlockSpec((1, out_dim), lambda i: (0, 0)),
            ],
            out_specs=pl.BlockSpec((tr, out_dim), lambda i: (i, 0)),
        ),
        compiler_params=pltpu.CompilerParams(
            dimension_semantics=("parallel",),
            vmem_limit_bytes=limit,
        ),
    )(x2, w1, b1.reshape(1, hid).astype(jnp.float32),
      w2, b2.reshape(1, out_dim).astype(jnp.float32))
    return out.reshape(*orig_shape[:-1], out_dim)


# ---------------------------------------------------------------------------
# Pure-jnp references (used for correctness checks)
# ---------------------------------------------------------------------------
def linear_ref(x, w, b=None, *, relu: bool = False):
    y = x @ w
    if b is not None:
        y = y + b
    return jnp.maximum(y, 0.0) if relu else y


def add_layer_norm_ref(x, gain, bias, residual=None, *, eps: float = 1e-6):
    y = x if residual is None else x + residual
    mean = jnp.mean(y, axis=-1, keepdims=True)
    std = jnp.std(y, axis=-1, keepdims=True, ddof=1)
    return gain * (y - mean) / (std + eps) + bias


def ffn_ref(x, w1, b1, w2, b2):
    return jnp.maximum(x @ w1 + b1, 0.0) @ w2 + b2


# ---------------------------------------------------------------------------
# Decoder forward (structure mirrors the PyTorch module; dropout = identity)
# ---------------------------------------------------------------------------
def _attention_core(q, k, v, mask, *, num_heads):
    n, lq, e = q.shape
    lk = k.shape[1]
    hd = e // num_heads

    def split(t, length):
        return t.reshape(n, length, num_heads, hd).transpose(0, 2, 1, 3)

    qh, kh, vh = split(q, lq), split(k, lk), split(v, lk)
    # TODO(synk): flash-style Pallas kernel once seq grows well beyond 8.
    scores = jnp.einsum("nhqd,nhkd->nhqk", qh, kh) / math.sqrt(hd)
    if mask is not None:
        scores = jnp.where(mask == 0, jnp.float32(-1e20), scores)
    attn = jax.nn.softmax(scores, axis=-1)
    out = jnp.einsum("nhqk,nhkd->nhqd", attn, vh)
    return out.transpose(0, 2, 1, 3).reshape(n, lq, e)


def self_attention(p, x, mask, *, num_heads, linear_fn):
    e = x.shape[-1]
    qkv = linear_fn(x, p["w_qkv"], None)           # one fused (E,3E) projection
    q, k, v = qkv[..., :e], qkv[..., e:2 * e], qkv[..., 2 * e:]
    out = _attention_core(q, k, v, mask, num_heads=num_heads)
    return linear_fn(out, p["wo"], p["bo"])


def cross_attention(p, x, enc_out, mask, *, num_heads, linear_fn):
    e = x.shape[-1]
    q = linear_fn(x, p["wq"], None)
    kv = linear_fn(enc_out, p["w_kv"], None)       # fused K/V (E,2E) projection
    k, v = kv[..., :e], kv[..., e:]
    out = _attention_core(q, k, v, mask, num_heads=num_heads)
    return linear_fn(out, p["wo"], p["bo"])


def decoder_layer(p, x, enc_out, src_mask, tgt_mask, *,
                  num_heads, linear_fn, norm_fn, ffn_fn):
    attn = self_attention(p["masked_attn"], x, tgt_mask,
                          num_heads=num_heads, linear_fn=linear_fn)
    x = norm_fn(x, p["norm1_g"], p["norm1_b"], residual=attn)
    attn = cross_attention(p["enc_attn"], x, enc_out, src_mask,
                           num_heads=num_heads, linear_fn=linear_fn)
    x = norm_fn(x, p["norm2_g"], p["norm2_b"], residual=attn)
    ff = ffn_fn(x, p["fc1_w"], p["fc1_b"], p["fc2_w"], p["fc2_b"])
    x = norm_fn(x, p["norm3_g"], p["norm3_b"], residual=ff)
    return x


def decoder_forward(params, tokens, enc_out, src_mask, tgt_mask, *,
                    num_heads, linear_fn, norm_fn, ffn_fn):
    n, seq_len = tokens.shape
    positions = jnp.broadcast_to(jnp.arange(seq_len), (n, seq_len))
    # TODO(synk): dropout treated as identity (eval mode).
    x = params["word_emb"][tokens] + params["pos_emb"][positions]
    for lp in params["layers"]:
        x = decoder_layer(lp, x, enc_out, src_mask, tgt_mask,
                          num_heads=num_heads, linear_fn=linear_fn,
                          norm_fn=norm_fn, ffn_fn=ffn_fn)
    return linear_fn(x, params["fc_out_w"], params["fc_out_b"])


def init_params(key, *, num_layers, embed, hidden, vocab, max_len):
    def dense(k, fan_in, fan_out):
        return jax.random.normal(k, (fan_in, fan_out), jnp.float32) / math.sqrt(fan_in)

    keys = jax.random.split(key, 3 + num_layers)
    params = {
        "word_emb": jax.random.normal(keys[0], (vocab, embed), jnp.float32) * 0.1,
        "pos_emb": jax.random.normal(keys[1], (max_len, embed), jnp.float32) * 0.1,
        "fc_out_w": dense(keys[2], embed, vocab),
        "fc_out_b": jnp.zeros((vocab,), jnp.float32),
        "layers": [],
    }
    for i in range(num_layers):
        lk = jax.random.split(keys[3 + i], 10)
        layer = {
            # Q/K/V fused once at init (no per-step concat under jit).
            "masked_attn": {
                "w_qkv": jnp.concatenate(
                    [dense(lk[0], embed, embed), dense(lk[1], embed, embed),
                     dense(lk[2], embed, embed)], axis=1),
                "wo": dense(lk[3], embed, embed),
                "bo": jnp.zeros((embed,), jnp.float32),
            },
            "enc_attn": {
                "wq": dense(lk[4], embed, embed),
                "w_kv": jnp.concatenate(
                    [dense(lk[5], embed, embed), dense(lk[6], embed, embed)], axis=1),
                "wo": dense(lk[7], embed, embed),
                "bo": jnp.zeros((embed,), jnp.float32),
            },
            "norm1_g": jnp.ones((embed,), jnp.float32), "norm1_b": jnp.zeros((embed,), jnp.float32),
            "norm2_g": jnp.ones((embed,), jnp.float32), "norm2_b": jnp.zeros((embed,), jnp.float32),
            "norm3_g": jnp.ones((embed,), jnp.float32), "norm3_b": jnp.zeros((embed,), jnp.float32),
            "fc1_w": dense(lk[8], embed, hidden), "fc1_b": jnp.zeros((hidden,), jnp.float32),
            "fc2_w": dense(lk[9], hidden, embed), "fc2_b": jnp.zeros((embed,), jnp.float32),
        }
        params["layers"].append(layer)
    return params


if __name__ == "__main__":
    num_layers, embed, heads, hidden = 2, 128, 4, 256
    vocab, max_len = 128, 16
    batch, seq = 2, 8

    root = jax.random.PRNGKey(0)
    k_params, k_tok, k_enc, k_ln = jax.random.split(root, 4)

    params = init_params(k_params, num_layers=num_layers, embed=embed,
                         hidden=hidden, vocab=vocab, max_len=max_len)
    tokens = jax.random.randint(k_tok, (batch, seq), 0, vocab)
    encoder_out = jax.random.normal(k_enc, (batch, seq, embed), jnp.float32)
    tgt_mask = jnp.tril(jnp.ones((seq, seq), jnp.int32))[None, None]   # causal
    src_mask = None

    # --- standalone fused residual-add + LayerNorm kernel check --------------
    xln = jax.random.normal(k_ln, (batch, seq, embed), jnp.float32)
    res = jax.random.normal(k_enc, (batch, seq, embed), jnp.float32)
    g = jnp.ones((embed,), jnp.float32)
    b = jnp.zeros((embed,), jnp.float32)
    y = jax.block_until_ready(layer_norm_pallas(xln, g, b, residual=res))
    y_ref = add_layer_norm_ref(xln, g, b, residual=res)
    assert y.shape == xln.shape and y.dtype == xln.dtype
    assert jnp.allclose(y, y_ref, atol=1e-3, rtol=1e-3), \
        float(jnp.max(jnp.abs(y - y_ref)))

    # --- full decoder forward (Pallas norms + linears + fused FFN) -----------
    fwd = jax.jit(functools.partial(decoder_forward, num_heads=heads,
                                    linear_fn=linear_pallas,
                                    norm_fn=layer_norm_pallas,
                                    ffn_fn=ffn_pallas))
    logits = jax.block_until_ready(
        fwd(params, tokens, encoder_out, src_mask, tgt_mask))

    logits_ref = decoder_forward(params, tokens, encoder_out, src_mask, tgt_mask,
                                 num_heads=heads, linear_fn=linear_ref,
                                 norm_fn=add_layer_norm_ref, ffn_fn=ffn_ref)
    assert logits.shape == (batch, seq, vocab)
    assert bool(jnp.all(jnp.isfinite(logits)))
    assert jnp.allclose(logits, logits_ref, atol=1e-2, rtol=1e-2), \
        float(jnp.max(jnp.abs(logits - logits_ref)))

    print("KERNEL_OK")
</pallas_src>

<mosaic_0001>
module attributes {stable_mosaic.version = 11 : i64} {
  func.func @_add_layer_norm_kernel(%arg0: i32, %arg1: memref<16x128xf32, #tpu.memory_space<vmem>>, %arg2: memref<16x128xf32, #tpu.memory_space<vmem>>, %arg3: memref<1x128xf32, #tpu.memory_space<vmem>>, %arg4: memref<1x128xf32, #tpu.memory_space<vmem>>, %arg5: memref<16x128xf32, #tpu.memory_space<vmem>>) attributes {dimension_semantics = [#tpu.dimension_semantics<parallel>], iteration_bounds = array<i64: 1>, scalar_prefetch = 0 : i64, scratch_operands = 0 : i64, tpu.core_type = #tpu.core_type<tc>, window_params = [{transform_indices = @transform_0, window_bounds = array<i64: 16, 128>}, {transform_indices = @transform_1, window_bounds = array<i64: 16, 128>}, {pipeline_mode = #tpu.pipeline_mode<synchronous>, transform_indices = @transform_2, window_bounds = array<i64: 1, 128>}, {pipeline_mode = #tpu.pipeline_mode<synchronous>, transform_indices = @transform_3, window_bounds = array<i64: 1, 128>}, {transform_indices = @transform_4, window_bounds = array<i64: 16, 128>}]} {
    %c0 = arith.constant 0 : index
    %c0_0 = arith.constant 0 : index
    %0 = vector.load %arg1[%c0, %c0_0] : memref<16x128xf32, #tpu.memory_space<vmem>>, vector<16x128xf32>
    %c0_1 = arith.constant 0 : index
    %c0_2 = arith.constant 0 : index
    %1 = vector.load %arg2[%c0_1, %c0_2] : memref<16x128xf32, #tpu.memory_space<vmem>>, vector<16x128xf32>
    %2 = arith.addf %0, %1 : vector<16x128xf32>
    %c0_3 = arith.constant 0 : index
    %c0_4 = arith.constant 0 : index
    %3 = vector.load %arg3[%c0_3, %c0_4] : memref<1x128xf32, #tpu.memory_space<vmem>>, vector<1x128xf32>
    %c0_5 = arith.constant 0 : index
    %c0_6 = arith.constant 0 : index
    %4 = vector.load %arg4[%c0_5, %c0_6] : memref<1x128xf32, #tpu.memory_space<vmem>>, vector<1x128xf32>
    %cst = arith.constant dense<0.000000e+00> : vector<16xf32>
    %5 = vector.multi_reduction <add>, %2, %cst [1] : vector<16x128xf32> to vector<16xf32>
    %6 = vector.shape_cast %5 : vector<16xf32> to vector<16x1xf32>
    %cst_7 = arith.constant 7.812500e-03 : f32
    %7 = vector.broadcast %cst_7 : f32 to vector<16x1xf32>
    %8 = arith.mulf %6, %7 : vector<16x1xf32>
    %9 = vector.broadcast %8 : vector<16x1xf32> to vector<16x128xf32>
    %10 = arith.subf %2, %9 : vector<16x128xf32>
    %11 = arith.mulf %10, %10 : vector<16x128xf32>
    %cst_8 = arith.constant dense<0.000000e+00> : vector<16xf32>
    %12 = vector.multi_reduction <add>, %11, %cst_8 [1] : vector<16x128xf32> to vector<16xf32>
    %13 = vector.shape_cast %12 : vector<16xf32> to vector<16x1xf32>
    %cst_9 = arith.constant 0.00787401571 : f32
    %14 = vector.broadcast %cst_9 : f32 to vector<16x1xf32>
    %15 = arith.mulf %13, %14 : vector<16x1xf32>
    %16 = math.sqrt %15 : vector<16x1xf32>
    %cst_10 = arith.constant 9.99999997E-7 : f32
    %17 = vector.broadcast %cst_10 : f32 to vector<16x1xf32>
    %18 = arith.addf %16, %17 : vector<16x1xf32>
    %19 = tpu.reciprocal %18 : vector<16x1xf32> -> vector<16x1xf32>
    %20 = vector.broadcast %19 : vector<16x1xf32> to vector<16x128xf32>
    %21 = arith.mulf %10, %20 : vector<16x128xf32>
    %22 = vector.broadcast %3 : vector<1x128xf32> to vector<16x128xf32>
    %23 = arith.mulf %21, %22 : vector<16x128xf32>
    %24 = vector.broadcast %4 : vector<1x128xf32> to vector<16x128xf32>
    %25 = arith.addf %23, %24 : vector<16x128xf32>
    %c0_11 = arith.constant 0 : index
    %c0_12 = arith.constant 0 : index
    %26 = vector.load %arg5[%c0_11, %c0_12] : memref<16x128xf32, #tpu.memory_space<vmem>>, vector<16x128xf32>
    tpu.vector_store %arg5[%c0_11, %c0_12], %25 {strides = array<i32>} : memref<16x128xf32, #tpu.memory_space<vmem>>, vector<16x128xf32>,
    return
  }
  func.func @transform_0(%arg0: i32) -> (i32, i32) {
    %c0_i32 = arith.constant 0 : i32
    %c0_i32_0 = arith.constant 0 : i32
    return %arg0, %c0_i32 : i32, i32
  }
  func.func @transform_1(%arg0: i32) -> (i32, i32) {
    %c0_i32 = arith.constant 0 : i32
    %c0_i32_0 = arith.constant 0 : i32
    return %arg0, %c0_i32 : i32, i32
  }
  func.func @transform_2(%arg0: i32) -> (i32, i32) {
    %c0_i32 = arith.constant 0 : i32
    %c0_i32_0 = arith.constant 0 : i32
    %c0_i32_1 = arith.constant 0 : i32
    return %c0_i32, %c0_i32_0 : i32, i32
  }
  func.func @transform_3(%arg0: i32) -> (i32, i32) {
    %c0_i32 = arith.constant 0 : i32
    %c0_i32_0 = arith.constant 0 : i32
    %c0_i32_1 = arith.constant 0 : i32
    return %c0_i32, %c0_i32_0 : i32, i32
  }
  func.func @transform_4(%arg0: i32) -> (i32, i32) {
    %c0_i32 = arith.constant 0 : i32
    %c0_i32_0 = arith.constant 0 : i32
    return %arg0, %c0_i32 : i32, i32
  }
}

</mosaic_0001>

<llo_original>
// kernel: tpu_custom_call.1
$region0: #{tpu_custom_call.1}
  #allocation0 [shape = 'u32[]', space=smem, size = 0x4, offset = 0x4, fixed_abs, tag = 'smem constant byte address 0x4 - core index']
  #allocation1 [shape = 'u32[144,128]{1,0:T(1,128)}', space=vmem, size = 0x12000, scoped, tag = 'internal scratch']
  %s0 = inlined_call_operand.hbm [shape: f32[16,128], index: 0, kind: input, shape index: {}]
  %s1 = inlined_call_operand.hbm [shape: f32[16,128], index: 1, kind: input, shape index: {}]
  %s2 = inlined_call_operand.vmem [shape: f32[1,128], index: 2, kind: input, shape index: {}]
  %s3 = inlined_call_operand.vmem [shape: f32[1,128], index: 3, kind: input, shape index: {}]
  %s4 = inlined_call_operand.hbm [shape: f32[16,128], index: 4, kind: output, shape index: {}]
  %s5 = sld [smem:[#allocation0]]
  $region34: #{tpu_custom_call.1} parent=0
    _
  %s7 = ssub.s32 1, %s5
  %s8 = scalar_select 0, %s7, %s5
  $region1: #{tpu_custom_call.1} parent=0
    #allocation2 [shape = 'u8[8192]{0}', space=vmem, size = 0x2000, scoped, tag = 'input window, operand 0, single buffered']
    #allocation3 [shape = 's32[1]{0}', space=sflag, size = 0x4, scoped, tag = 'scoped memory for tpu_custom_call.1']
    #allocation4 [shape = 's32[1]{0}', space=sflag, size = 0x4, scoped, tag = 'scoped memory for tpu_custom_call.1']
    #allocation5 [shape = 'u8[8192]{0}', space=vmem, size = 0x2000, scoped, tag = 'input window, operand 1, single buffered']
    #allocation6 [shape = 's32[1]{0}', space=sflag, size = 0x4, scoped, tag = 'scoped memory for tpu_custom_call.1']
    #allocation7 [shape = 'u8[8192]{0}', space=vmem, size = 0x2000, scoped, tag = 'output window, operand 0, single buffered']
    %9 = vsyncpa [#allocation3], 0
    %10 = vsyncpa [#allocation6], 0
    %11 = vsyncpa [#allocation4], 0
    // Predicated region
    $region2: #{tpu_custom_call.1} parent=1 // pred_check
      _
    $region3: #{tpu_custom_call.1} parent=1 // pred_check_branch
      %13 = sbr.rel (0) target = $region5
    $region4: #{tpu_custom_call.1} parent=1 // pred_region
      %s15 = ssub.s32 256, 256
      %16 = vsyncadd [#allocation3], %s15
      %s17 = sshll.u32 [#allocation2], 4
      %s18 = int_to_ptr.vmem [resolvable:$true] %s17
      %23 = dma.hbm_to_vmem [thread:$0]  %s0, 256, %s18, [#allocation3], 128, 128, 8
    $region5: #{tpu_custom_call.1} parent=1 // pred_fallthru
      _
    // Predicated region
    $region6: #{tpu_custom_call.1} parent=1 // pred_check
      _
    $region7: #{tpu_custom_call.1} parent=1 // pred_check_branch
      %25 = sbr.rel (0) target = $region9
    $region8: #{tpu_custom_call.1} parent=1 // pred_region
      %s27 = ssub.s32 256, 256
      %28 = vsyncadd [#allocation6], %s27
      %s29 = sshll.u32 [#allocation5], 4
      %s30 = int_to_ptr.vmem [resolvable:$true] %s29
      %35 = dma.hbm_to_vmem [thread:$0]  %s1, 256, %s30, [#allocation6], 128, 128, 8
    $region9: #{tpu_custom_call.1} parent=1 // pred_fallthru
      _
    // Predicated region
    $region10: #{tpu_custom_call.1} parent=1 // pred_check
      _
    $region11: #{tpu_custom_call.1} parent=1 // pred_check_branch
      %37 = sbr.rel (0) target = $region13
    $region12: #{tpu_custom_call.1} parent=1 // pred_region
      _
    $region13: #{tpu_custom_call.1} parent=1 // pred_fallthru
      _
    // Predicated region
    $region14: #{tpu_custom_call.1} parent=1 // pred_check
      _
    $region15: #{tpu_custom_call.1} parent=1 // pred_check_branch
      %39 = sbr.rel (0) target = $region17
    $region16: #{tpu_custom_call.1} parent=1 // pred_region
      _
    $region17: #{tpu_custom_call.1} parent=1 // pred_fallthru
      _
    // Predicated region
    $region18: #{tpu_custom_call.1} parent=1 // pred_check
      _
    $region19: #{tpu_custom_call.1} parent=1 // pred_check_branch
      %41 = sbr.rel (0) target = $region21
    $region20: #{tpu_custom_call.1} parent=1 // pred_region
      %42 = dma.done [#allocation3], 256
    $region21: #{tpu_custom_call.1} parent=1 // pred_fallthru
      _
    // Predicated region
    $region22: #{tpu_custom_call.1} parent=1 // pred_check
      _
    $region23: #{tpu_custom_call.1} parent=1 // pred_check_branch
      %44 = sbr.rel (0) target = $region25
    $region24: #{tpu_custom_call.1} parent=1 // pred_region
      %45 = dma.done [#allocation6], 256
    $region25: #{tpu_custom_call.1} parent=1 // pred_fallthru
      _
    %v46 = vld [vmem:[#allocation2] sm:$0xff]
    %v47 = vld [vmem:[#allocation2 + $0x8] sm:$0xff]
    %v48 = vld [vmem:[#allocation5] sm:$0xff]
    %v49 = vld [vmem:[#allocation5 + $0x8] sm:$0xff]
    %v50 = vadd.f32 %v46, %v48
    %v51 = vadd.f32 %v47, %v49
    %v52 = vld [vmem:[%s2] sm:$0x1]
    %v53 = vld [vmem:[%s3] sm:$0x1]
    %54 = vadd.xlane.f32.xlu0 %v50
    %v55 = vpop.xlane.xlu0 %54
    %56 = vadd.xlane.f32.xlu0 %v51
    %v57 = vpop.xlane.xlu0 %56
    %v58 = vmul.f32 %v55, 0.0078125
    %v59 = vmul.f32 %v57, 0.0078125
    %v60 = vsub.f32 %v50, %v58
    %v61 = vsub.f32 %v51, %v59
    %v62 = vmul.f32 %v60, %v60
    %v63 = vmul.f32 %v61, %v61
    %64 = vadd.xlane.f32.xlu0 %v62
    %v65 = vpop.xlane.xlu0 %64
    %66 = vadd.xlane.f32.xlu0 %v63
    %v67 = vpop.xlane.xlu0 %66
    %v68 = vmul.f32 %v65, 0.007874016
    %v69 = vmul.f32 %v67, 0.007874016
    %v70 = vrsqrt.pop %v68
    %v71 = vmul.f32 %v68, %v70
    %vm72 = vcmp.eq.f32.partialorder %v68, inf
    %v73 = vsel %vm72, %v68, %v71
    %vm74 = vcmp.eq.f32.partialorder %v68, 0.0
    %v75 = vand.u32 %v68, 2147483648
    %v76 = vsel %vm74, %v75, %v73
    %v77 = vrsqrt.pop %v69
    %v78 = vmul.f32 %v69, %v77
    %vm79 = vcmp.eq.f32.partialorder %v69, inf
    %v80 = vsel %vm79, %v69, %v78
    %vm81 = vcmp.eq.f32.partialorder %v69, 0.0
    %v82 = vand.u32 %v69, 2147483648
    %v83 = vsel %vm81, %v82, %v80
    %v84 = vadd.f32 %v76, 1e-06
    %v85 = vadd.f32 %v83, 1e-06
    %v86 = vrcp.pop %v84
    %v87 = vrcp.pop %v85
    %v88 = vmul.f32 %v60, %v86
    %v89 = vmul.f32 %v61, %v87
    %v91 = vlaneseq
    %v92 = vshrl.u32 %v91, 7
    %v93 = vsub.s32 0, %v92
    %v94 = vrot.slane %v52, %v93
    %v96 = vmul.f32 %v88, %v94
    %v97 = vmul.f32 %v89, %v94
    %v99 = vlaneseq
    %v100 = vshrl.u32 %v99, 7
    %v101 = vsub.s32 0, %v100
    %v102 = vrot.slane %v53, %v101
    %v104 = vadd.f32 %v96, %v102
    %v105 = vadd.f32 %v97, %v102
    %106 = vst [vmem:[#allocation7] sm:$0xff] %v104
    %107 = vst [vmem:[#allocation7 + $0x8] sm:$0xff] %v105
    // Predicated region
    $region26: #{tpu_custom_call.1} parent=1 // pred_check
      _
    $region27: #{tpu_custom_call.1} parent=1 // pred_check_branch
      %109 = sbr.rel (0) target = $region29
    $region28: #{tpu_custom_call.1} parent=1 // pred_region
      %s111 = ssub.s32 256, 256
      %112 = vsyncadd [#allocation4], %s111
      %s113 = sshll.u32 [#allocation7], 4
      %s114 = int_to_ptr.vmem [resolvable:$true] %s113
      %119 = dma.vmem_to_hbm [thread:$0]  %s114, 256, %s4, [#allocation4], 128, 128, 8
    $region29: #{tpu_custom_call.1} parent=1 // pred_fallthru
      _
    // Predicated region
    $region30: #{tpu_custom_call.1} parent=1 // pred_check
      _
    $region31: #{tpu_custom_call.1} parent=1 // pred_check_branch
      %121 = sbr.rel (0) target = $region33
    $region32: #{tpu_custom_call.1} parent=1 // pred_region
      %122 = dma.done [#allocation4], 256
    $region33: #{tpu_custom_call.1} parent=1 // pred_fallthru
      _
    %123 = vsyncpa [#allocation3], 1
    %124 = vsyncpa [#allocation6], 1
    %125 = vsyncpa [#allocation4], 1

</llo_original>
